<compile_context>
chip_gen: v7x
topology: tpu7x:2x2x1
jax: 0.10.0
libtpu: 0.0.40
codegen_flags: <defaults>
</compile_context>

<pallas_src>
import math

import jax
import jax.numpy as jnp
from jax import lax
from jax.experimental import pallas as pl
from jax.experimental.pallas import tpu as pltpu


def _round_up(x, m):
    return ((x + m - 1) // m) * m


# ----------------------------- Pallas kernel ------------------------------------
def make_policy_kernel(batch, in_dim, hid, n_disc, act_dim, lanes,
                       r_w1, r_w2, r_b12, r_wh, r_bh):
    B, D, H, N, A = batch, in_dim, hid, n_disc, act_dim
    W_HEAD = 1 + N + A          # [ value | logits(N) | mu(A) ]
    W = 3 + N + 2 * A           # per-row payload width before the stats/pad region

    def kernel(scal_ref, xin_ref, p_ref, out_ref):
        # ---- single stacked input: rows 0..B-1 = obs, row B = old_mean, row B+1 = old_var
        xin = xin_ref[...]                                   # (B+2, D) f32
        x = xin[0:B, :]
        old_mean = xin[B:B + 1, :]
        old_var = xin[B + 1:B + 2, :]
        old_count = scal_ref[0]                              # SMEM scalar
        lp_const = scal_ref[1]                               # SMEM scalar

        # ---- RunningMeanStd.update, fused (obs already resident in VMEM) ----
        bc = jnp.float32(B)
        bmean = jnp.mean(x, axis=0, keepdims=True)
        diff = x - bmean
        bvar = jnp.mean(diff * diff, axis=0, keepdims=True)   # unbiased=False
        delta = bmean - old_mean
        tot = old_count + bc
        new_mean = old_mean + delta * (bc / tot)
        m2 = old_var * old_count + bvar * bc + delta * delta * (old_count * bc / tot)
        new_var = m2 / tot
        new_std = jnp.sqrt(new_var + 1e-8)

        # ---- normalize + clamp (uses the *updated* running stats, like the torch module) ----
        xn = jnp.clip((x - new_mean) / new_std, -5.0, 5.0)

        # ---- static slices into the single parameter slab (zero runtime cost) ----
        w1 = p_ref[r_w1:r_w1 + D, 0:H]
        w2 = p_ref[r_w2:r_w2 + H, 0:H]
        b1 = p_ref[r_b12:r_b12 + 1, 0:H]
        b2 = p_ref[r_b12 + 1:r_b12 + 2, 0:H]
        wh = p_ref[r_wh:r_wh + H, 0:W_HEAD]
        bh = p_ref[r_bh:r_bh + 1, 0:W_HEAD]

        # ---- MLP backbone: two tanh hidden layers ----
        h = jnp.tanh(jnp.dot(xn, w1, preferred_element_type=jnp.float32) + b1)
        h = jnp.tanh(jnp.dot(h, w2, preferred_element_type=jnp.float32) + b2)

        # ---- fused heads: [ value | discrete logits | continuous mu ] ----
        heads = jnp.dot(h, wh, preferred_element_type=jnp.float32) + bh   # (B, 1+N+A)
        logits = heads[:, 1:1 + N]
        mu = heads[:, 1 + N:1 + N + A]

        # deterministic discrete action = argmax(logits) (first maximal index)
        m = jnp.max(logits, axis=-1, keepdims=True)
        col = lax.broadcasted_iota(jnp.int32, logits.shape, 1)
        dact = jnp.min(jnp.where(logits == m, col, N), axis=-1, keepdims=True)

        # Categorical log_prob(argmax) = max - logsumexp ; Normal part is lp_const
        lse = m + jnp.log(jnp.sum(jnp.exp(logits - m), axis=-1, keepdims=True))
        lp = (m - lse) + lp_const                             # (B, 1)

        # squash continuous action to [0, 1]
        cact = (jnp.tanh(mu) + 1.0) * 0.5                     # (B, A)

        # ---- fold the RMS stats into the slab's pad lanes (row 0 = mean, row 1 = var) ----
        tail_rows = [new_mean, new_var]
        if B > 2:
            tail_rows.append(jnp.zeros((B - 2, D), jnp.float32))
        tail = jnp.concatenate(tail_rows, axis=0)             # (B, D)

        pieces = [heads, lp, dact.astype(jnp.float32), cact, tail]
        pad = lanes - (W + D)
        if pad > 0:
            pieces.append(jnp.zeros((B, pad), jnp.float32))
        # single unmasked lane-dense writeback
        out_ref[...] = jnp.concatenate(pieces, axis=-1)

    return kernel


# ----------------------------- param packing ------------------------------------
def pack_params(params):
    """Pack all constant parameters into ONE sublane-aligned f32 slab (built once)."""
    (w1, b1, w2, b2, wv, bv, wd, bd, wm, bm, log_std) = params
    D, H = w1.shape
    N = wd.shape[1]
    A = wm.shape[1]
    W_HEAD = 1 + N + A
    L = max(H, W_HEAD)

    def ru8(x):
        return _round_up(x, 8)

    r_w1 = 0
    r_w2 = ru8(r_w1 + D)
    r_b12 = ru8(r_w2 + H)
    r_wh = ru8(r_b12 + 2)
    r_bh = ru8(r_wh + H)
    rows = ru8(r_bh + 1)

    w_head = jnp.concatenate([wv, wd, wm], axis=1)            # (H, 1+N+A)
    b_head = jnp.concatenate([bv, bd, bm])                    # (1+N+A,)

    slab = jnp.zeros((rows, L), jnp.float32)
    slab = slab.at[r_w1:r_w1 + D, 0:H].set(w1)
    slab = slab.at[r_w2:r_w2 + H, 0:H].set(w2)
    slab = slab.at[r_b12, 0:H].set(b1)
    slab = slab.at[r_b12 + 1, 0:H].set(b2)
    slab = slab.at[r_wh:r_wh + H, 0:W_HEAD].set(w_head)
    slab = slab.at[r_bh, 0:W_HEAD].set(b_head)

    # NOTE: if log_std is trained, re-run pack_params (lp_const would go stale otherwise).
    lp_const = -(jnp.sum(log_std) + 0.5 * A * math.log(2.0 * math.pi))

    return dict(param_slab=slab, lp_const=lp_const, log_std=log_std,
                in_dim=int(D), hid=int(H), n_disc=int(N), act_dim=int(A),
                offsets=(r_w1, r_w2, r_b12, r_wh, r_bh))


# ----------------------------- jitted wrapper ------------------------------------
def build_forward(packed):
    """Returns a jitted fwd(obs, mean, var, count) implementing the stochastic=False path."""
    D, H = packed["in_dim"], packed["hid"]
    N, A = packed["n_disc"], packed["act_dim"]
    W = 3 + N + 2 * A
    lanes = max(128, _round_up(W + D, 128))   # pad region always fits new_mean/new_var
    r_w1, r_w2, r_b12, r_wh, r_bh = packed["offsets"]
    param_slab = packed["param_slab"]
    lp_const = jnp.asarray(packed["lp_const"], jnp.float32)
    log_std = packed["log_std"]

    vmem = pl.BlockSpec(memory_space=pltpu.MemorySpace.VMEM)
    smem = pl.BlockSpec(memory_space=pltpu.MemorySpace.SMEM)

    @jax.jit
    def fwd(obs, mean, var, count):
        B = obs.shape[0]
        assert B >= 2, "stats are folded into slab rows 0/1; need batch >= 2"
        flat = obs.reshape(B, -1).astype(jnp.float32)          # (B, D)

        # one DMA for all per-call tensor data: obs rows + old mean/var rows
        xin = jnp.concatenate(
            [flat,
             mean.reshape(1, D).astype(jnp.float32),
             var.reshape(1, D).astype(jnp.float32)], axis=0)   # (B+2, D)
        scalars = jnp.stack([jnp.asarray(count, jnp.float32), lp_const])   # (2,) SMEM

        kernel = make_policy_kernel(B, D, H, N, A, lanes,
                                    r_w1, r_w2, r_b12, r_wh, r_bh)
        slab = pl.pallas_call(
            kernel,
            out_shape=jax.ShapeDtypeStruct((B, lanes), jnp.float32),
            in_specs=[smem, vmem, vmem],
            out_specs=vmem,
        )(scalars, xin, param_slab)

        # cheap slices, fused under this jit
        value = slab[:, 0]
        logits = slab[:, 1:1 + N]
        mu = slab[:, 1 + N:1 + N + A]
        lp = slab[:, 1 + N + A]
        dact = slab[:, 2 + N + A].astype(jnp.int32)            # exact for N < 2^24
        cact = slab[:, 3 + N + A:3 + N + 2 * A]
        new_mean = slab[0, W:W + D]
        new_var = slab[1, W:W + D]
        new_count = jnp.asarray(count, jnp.float32) + jnp.float32(B)
        return {
            "discrete_action": dact,
            "continuous_action": cact,
            "log_prob": lp,
            "value": value,
            "discrete_logits": logits,
            "continuous_mu": mu,
            "continuous_log_std": log_std,
            "new_rms": (new_mean, new_var, new_count),
        }

    return fwd


# ----------------------------- param init ---------------------------------------
def make_params(key, in_dim, hid, n_discrete, act_dim):
    ks = jax.random.split(key, 5)

    def lin(k, fan_in, fan_out, gain=1.0):
        w = gain * jax.random.normal(k, (fan_in, fan_out), jnp.float32) / jnp.sqrt(fan_in)
        b = jnp.zeros((fan_out,), jnp.float32)
        return w, b

    w1, b1 = lin(ks[0], in_dim, hid, 1.0)
    w2, b2 = lin(ks[1], hid, hid, 1.0)
    wv, bv = lin(ks[2], hid, 1, 1.0)
    wd, bd = lin(ks[3], hid, n_discrete, 0.01)
    wm, bm = lin(ks[4], hid, act_dim, 0.01)
    log_std = jnp.zeros((act_dim,), jnp.float32)
    return (w1, b1, w2, b2, wv, bv, wd, bd, wm, bm, log_std)


# ----------------------------- reference (pure JAX) ------------------------------
def reference_forward(obs, params, rms_state):
    B = obs.shape[0]
    flat = obs.reshape(B, -1).astype(jnp.float32)
    mean, var, count = rms_state
    bm_ = jnp.mean(flat, 0); bv_ = jnp.var(flat, 0); bc = jnp.float32(B)
    delta = bm_ - mean; tot = count + bc
    new_mean = mean + delta * bc / tot
    new_var = (var * count + bv_ * bc + delta ** 2 * count * bc / tot) / tot
    std = jnp.sqrt(new_var + 1e-8)
    x = jnp.clip((flat - new_mean) / std, -5.0, 5.0)
    (w1, b1, w2, b2, wv, bv, wd, bd, wm, bmu, log_std) = params
    h = jnp.tanh(x @ w1 + b1); h = jnp.tanh(h @ w2 + b2)
    value = (h @ wv + bv)[:, 0]
    logits = h @ wd + bd
    mu = h @ wm + bmu
    dact = jnp.argmax(logits, axis=-1)
    lp_d = jnp.max(logits, -1) - jax.scipy.special.logsumexp(logits, -1)
    lp_c = -(jnp.sum(log_std) + 0.5 * log_std.shape[0] * math.log(2 * math.pi)) * jnp.ones((B,))
    return dact, (jnp.tanh(mu) + 1) / 2, lp_d + lp_c, value, new_mean, new_var


# ----------------------------- main ----------------------------------------------
if __name__ == "__main__":
    B, D, HID, N_DISC, ACT_DIM = 8, 16, 32, 5, 3
    key = jax.random.PRNGKey(0)
    k_obs, k_par = jax.random.split(key)
    obs = jax.random.normal(k_obs, (B, D), jnp.float32)        # ob_space.shape = (16,)
    params = make_params(k_par, D, HID, N_DISC, ACT_DIM)
    packed = pack_params(params)
    fwd = build_forward(packed)

    rms_state = (jnp.zeros((D,), jnp.float32),
                 jnp.ones((D,), jnp.float32),
                 jnp.float32(1e-4))

    out = fwd(obs, *rms_state)
    jax.block_until_ready(out)

    # sanity check against pure-JAX reference
    r_dact, r_cact, r_lp, r_val, r_mean, r_var = reference_forward(obs, params, rms_state)
    assert jnp.all(out["discrete_action"] == r_dact)
    assert jnp.all(out["discrete_action"] == jnp.argmax(out["discrete_logits"], axis=-1))
    assert jnp.max(jnp.abs(out["continuous_action"] - r_cact)) < 1e-4
    assert jnp.max(jnp.abs(out["log_prob"] - r_lp)) < 1e-4
    assert jnp.max(jnp.abs(out["value"] - r_val)) < 1e-4
    assert jnp.max(jnp.abs(out["new_rms"][0] - r_mean)) < 1e-5
    assert jnp.max(jnp.abs(out["new_rms"][1] - r_var)) < 1e-5

    print("KERNEL_OK")
</pallas_src>

<mosaic_0001>
module attributes {stable_mosaic.version = 11 : i64} {
  func.func @kernel(%arg0: memref<2xf32, #tpu.memory_space<smem>>, %arg1: memref<10x16xf32, #tpu.memory_space<vmem>>, %arg2: memref<96x32xf32, #tpu.memory_space<vmem>>, %arg3: memref<8x128xf32, #tpu.memory_space<vmem>>) attributes {dimension_semantics = [], scalar_prefetch = 0 : i64, scratch_operands = 0 : i64, tpu.core_type = #tpu.core_type<tc>} {
    %c0 = arith.constant 0 : index
    %c0_0 = arith.constant 0 : index
    %0 = vector.load %arg1[%c0, %c0_0] : memref<10x16xf32, #tpu.memory_space<vmem>>, vector<10x16xf32>
    %1 = vector.extract_strided_slice %0 {offsets = [0, 0], sizes = [8, 16], strides = [1, 1]} : vector<10x16xf32> to vector<8x16xf32>
    %2 = vector.extract_strided_slice %0 {offsets = [8, 0], sizes = [1, 16], strides = [1, 1]} : vector<10x16xf32> to vector<1x16xf32>
    %3 = vector.extract_strided_slice %0 {offsets = [9, 0], sizes = [1, 16], strides = [1, 1]} : vector<10x16xf32> to vector<1x16xf32>
    %c0_1 = arith.constant 0 : index
    %4 = memref.load %arg0[%c0_1] : memref<2xf32, #tpu.memory_space<smem>>
    %c1 = arith.constant 1 : index
    %5 = memref.load %arg0[%c1] : memref<2xf32, #tpu.memory_space<smem>>
    %cst = arith.constant dense<0.000000e+00> : vector<16xf32>
    %6 = vector.multi_reduction <add>, %1, %cst [0] : vector<8x16xf32> to vector<16xf32>
    %7 = vector.shape_cast %6 : vector<16xf32> to vector<1x16xf32>
    %cst_2 = arith.constant 8.000000e+00 : f32
    %8 = vector.broadcast %cst_2 : f32 to vector<1x16xf32>
    %9 = arith.divf %7, %8 : vector<1x16xf32>
    %10 = vector.broadcast %9 : vector<1x16xf32> to vector<8x16xf32>
    %11 = arith.subf %1, %10 : vector<8x16xf32>
    %12 = arith.mulf %11, %11 : vector<8x16xf32>
    %cst_3 = arith.constant dense<0.000000e+00> : vector<16xf32>
    %13 = vector.multi_reduction <add>, %12, %cst_3 [0] : vector<8x16xf32> to vector<16xf32>
    %14 = vector.shape_cast %13 : vector<16xf32> to vector<1x16xf32>
    %cst_4 = arith.constant 8.000000e+00 : f32
    %15 = vector.broadcast %cst_4 : f32 to vector<1x16xf32>
    %16 = arith.divf %14, %15 : vector<1x16xf32>
    %17 = arith.subf %9, %2 : vector<1x16xf32>
    %cst_5 = arith.constant 8.000000e+00 : f32
    %18 = arith.addf %4, %cst_5 : f32
    %cst_6 = arith.constant 8.000000e+00 : f32
    %19 = arith.divf %cst_6, %18 : f32
    %20 = vector.broadcast %19 : f32 to vector<1x16xf32>
    %21 = arith.mulf %17, %20 : vector<1x16xf32>
    %22 = arith.addf %2, %21 : vector<1x16xf32>
    %23 = vector.broadcast %4 : f32 to vector<1x16xf32>
    %24 = arith.mulf %3, %23 : vector<1x16xf32>
    %cst_7 = arith.constant 8.000000e+00 : f32
    %25 = vector.broadcast %cst_7 : f32 to vector<1x16xf32>
    %26 = arith.mulf %16, %25 : vector<1x16xf32>
    %27 = arith.addf %24, %26 : vector<1x16xf32>
    %28 = arith.mulf %17, %17 : vector<1x16xf32>
    %cst_8 = arith.constant 8.000000e+00 : f32
    %29 = arith.mulf %4, %cst_8 : f32
    %30 = arith.divf %29, %18 : f32
    %31 = vector.broadcast %30 : f32 to vector<1x16xf32>
    %32 = arith.mulf %28, %31 : vector<1x16xf32>
    %33 = arith.addf %27, %32 : vector<1x16xf32>
    %34 = vector.broadcast %18 : f32 to vector<1x16xf32>
    %35 = arith.divf %33, %34 : vector<1x16xf32>
    %cst_9 = arith.constant 9.99999993E-9 : f32
    %36 = vector.broadcast %cst_9 : f32 to vector<1x16xf32>
    %37 = arith.addf %35, %36 : vector<1x16xf32>
    %38 = math.sqrt %37 : vector<1x16xf32>
    %39 = vector.broadcast %22 : vector<1x16xf32> to vector<8x16xf32>
    %40 = arith.subf %1, %39 : vector<8x16xf32>
    %41 = vector.broadcast %38 : vector<1x16xf32> to vector<8x16xf32>
    %42 = arith.divf %40, %41 : vector<8x16xf32>
    %cst_10 = arith.constant -5.000000e+00 : f32
    %cst_11 = arith.constant 5.000000e+00 : f32
    %43 = vector.broadcast %cst_10 : f32 to vector<8x16xf32>
    %44 = arith.maximumf %43, %42 : vector<8x16xf32>
    %45 = vector.broadcast %cst_11 : f32 to vector<8x16xf32>
    %46 = arith.minimumf %45, %44 : vector<8x16xf32>
    %c0_12 = arith.constant 0 : index
    %c0_13 = arith.constant 0 : index
    %47 = vector.load %arg2[%c0_12, %c0_13] : memref<96x32xf32, #tpu.memory_space<vmem>>, vector<16x32xf32>
    %c16 = arith.constant 16 : index
    %c0_14 = arith.constant 0 : index
    %48 = vector.load %arg2[%c16, %c0_14] : memref<96x32xf32, #tpu.memory_space<vmem>>, vector<32x32xf32>
    %c48 = arith.constant 48 : index
    %c0_15 = arith.constant 0 : index
    %49 = vector.load %arg2[%c48, %c0_15] : memref<96x32xf32, #tpu.memory_space<vmem>>, vector<1x32xf32>
    %c49 = arith.constant 49 : index
    %c0_16 = arith.constant 0 : index
    %50 = vector.load %arg2[%c49, %c0_16] : memref<96x32xf32, #tpu.memory_space<vmem>>, vector<1x32xf32>
    %c56 = arith.constant 56 : index
    %c0_17 = arith.constant 0 : index
    %51 = vector.load %arg2[%c56, %c0_17] : memref<96x32xf32, #tpu.memory_space<vmem>>, vector<32x9xf32>
    %c88 = arith.constant 88 : index
    %c0_18 = arith.constant 0 : index
    %52 = vector.load %arg2[%c88, %c0_18] : memref<96x32xf32, #tpu.memory_space<vmem>>, vector<1x9xf32>
    %cst_19 = arith.constant dense<0.000000e+00> : vector<8x32xf32>
    %53 = tpu.matmul %46, %47, %cst_19 {dimension_numbers = #tpu.dot_dimension_numbers<[1], [0], [0], [1], [0, 0, 1, 1], [], []>} : vector<8x16xf32>, vector<16x32xf32>, vector<8x32xf32> -> vector<8x32xf32>
    %54 = vector.broadcast %49 : vector<1x32xf32> to vector<8x32xf32>
    %55 = arith.addf %53, %54 : vector<8x32xf32>
    %56 = math.tanh %55 : vector<8x32xf32>
    %cst_20 = arith.constant dense<0.000000e+00> : vector<8x32xf32>
    %57 = tpu.matmul %56, %48, %cst_20 {dimension_numbers = #tpu.dot_dimension_numbers<[1], [0], [0], [1], [0, 0, 1, 1], [], []>} : vector<8x32xf32>, vector<32x32xf32>, vector<8x32xf32> -> vector<8x32xf32>
    %58 = vector.broadcast %50 : vector<1x32xf32> to vector<8x32xf32>
    %59 = arith.addf %57, %58 : vector<8x32xf32>
    %60 = math.tanh %59 : vector<8x32xf32>
    %cst_21 = arith.constant dense<0.000000e+00> : vector<8x9xf32>
    %61 = tpu.matmul %60, %51, %cst_21 {dimension_numbers = #tpu.dot_dimension_numbers<[1], [0], [0], [1], [0, 0, 1, 1], [], []>} : vector<8x32xf32>, vector<32x9xf32>, vector<8x9xf32> -> vector<8x9xf32>
    %62 = vector.broadcast %52 : vector<1x9xf32> to vector<8x9xf32>
    %63 = arith.addf %61, %62 : vector<8x9xf32>
    %64 = vector.extract_strided_slice %63 {offsets = [0, 1], sizes = [8, 5], strides = [1, 1]} : vector<8x9xf32> to vector<8x5xf32>
    %65 = vector.extract_strided_slice %63 {offsets = [0, 6], sizes = [8, 3], strides = [1, 1]} : vector<8x9xf32> to vector<8x3xf32>
    %cst_22 = arith.constant dense<0xFF800000> : vector<8xf32>
    %66 = vector.multi_reduction <maximumf>, %64, %cst_22 [1] : vector<8x5xf32> to vector<8xf32>
    %67 = vector.shape_cast %66 : vector<8xf32> to vector<8x1xf32>
    %68 = tpu.iota {dimensions = array<i32: 1>} : vector<8x5xi32>
    %69 = vector.broadcast %67 : vector<8x1xf32> to vector<8x5xf32>
    %70 = arith.cmpf oeq, %64, %69 : vector<8x5xf32>
    %c5_i32 = arith.constant 5 : i32
    %71 = vector.broadcast %c5_i32 : i32 to vector<8x5xi32>
    %72 = arith.select %70, %68, %71 : vector<8x5xi1>, vector<8x5xi32>
    %cst_23 = arith.constant dense<2147483647> : vector<8xi32>
    %73 = vector.multi_reduction <minsi>, %72, %cst_23 [1] : vector<8x5xi32> to vector<8xi32>
    %74 = vector.shape_cast %73 : vector<8xi32> to vector<8x1xi32>
    %75 = vector.broadcast %67 : vector<8x1xf32> to vector<8x5xf32>
    %76 = arith.subf %64, %75 : vector<8x5xf32>
    %77 = math.exp %76 : vector<8x5xf32>
    %cst_24 = arith.constant dense<0.000000e+00> : vector<8xf32>
    %78 = vector.multi_reduction <add>, %77, %cst_24 [1] : vector<8x5xf32> to vector<8xf32>
    %79 = vector.shape_cast %78 : vector<8xf32> to vector<8x1xf32>
    %80 = math.log %79 : vector<8x1xf32>
    %81 = arith.addf %67, %80 : vector<8x1xf32>
    %82 = arith.subf %67, %81 : vector<8x1xf32>
    %83 = vector.broadcast %5 : f32 to vector<8x1xf32>
    %84 = arith.addf %82, %83 : vector<8x1xf32>
    %85 = math.tanh %65 : vector<8x3xf32>
    %cst_25 = arith.constant 1.000000e+00 : f32
    %86 = vector.broadcast %cst_25 : f32 to vector<8x3xf32>
    %87 = arith.addf %85, %86 : vector<8x3xf32>
    %cst_26 = arith.constant 5.000000e-01 : f32
    %88 = vector.broadcast %cst_26 : f32 to vector<8x3xf32>
    %89 = arith.mulf %87, %88 : vector<8x3xf32>
    %cst_27 = arith.constant 0.000000e+00 : f32
    %90 = vector.broadcast %cst_27 : f32 to vector<6x16xf32>
    %91 = tpu.concatenate %22, %35, %90 in 0 : vector<1x16xf32>, vector<1x16xf32>, vector<6x16xf32> -> vector<8x16xf32>
    %92 = arith.sitofp %74 : vector<8x1xi32> to vector<8x1xf32>
    %cst_28 = arith.constant 0.000000e+00 : f32
    %93 = vector.broadcast %cst_28 : f32 to vector<8x98xf32>
    %94 = tpu.concatenate %63, %84, %92, %89, %91, %93 in 1 : vector<8x9xf32>, vector<8x1xf32>, vector<8x1xf32>, vector<8x3xf32>, vector<8x16xf32>, vector<8x98xf32> -> vector<8x128xf32>
    %c0_29 = arith.constant 0 : index
    %c0_30 = arith.constant 0 : index
    %95 = vector.load %arg3[%c0_29, %c0_30] : memref<8x128xf32, #tpu.memory_space<vmem>>, vector<8x128xf32>
    tpu.vector_store %arg3[%c0_29, %c0_30], %94 {strides = array<i32>} : memref<8x128xf32, #tpu.memory_space<vmem>>, vector<8x128xf32>,
    return
  }
}

</mosaic_0001>

<llo_original>
// kernel: fwd.1
$region0: #{fwd.1}
  #allocation0 [shape = 'u32[]', space=smem, size = 0x4, offset = 0x4, fixed_abs, tag = 'smem constant byte address 0x4 - core index']
  #allocation1 [shape = 'u32[144,128]{1,0:T(1,128)}', space=vmem, size = 0x12000, scoped, tag = 'internal scratch']
  %s0 = inlined_call_operand.vmem [shape: f32[2], index: 0, kind: input, shape index: {}]
  %s1 = inlined_call_operand.vmem [shape: f32[10,16], index: 1, kind: input, shape index: {}]
  %s2 = inlined_call_operand.hbm [shape: f32[96,32], index: 2, kind: input, shape index: {}]
  %s3 = inlined_call_operand.vmem [shape: f32[8,128], index: 3, kind: output, shape index: {}]
  %s4 = sld [smem:[#allocation0]]
  $region30: #{fwd.1} parent=0
    _
  %s6 = ssub.s32 1, %s4
  %s7 = scalar_select 0, %s6, %s4
  $region1: #{fwd.1} parent=0
    #allocation2 [shape = 'u8[512]{0}', space=smem, size = 0x200, scoped, tag = 'input window, operand 0, single buffered']
    #allocation3 [shape = 's32[1]{0}', space=sflag, size = 0x4, scoped, tag = 'scoped memory for fwd.1']
    #allocation4 [shape = 's32[1]{0}', space=sflag, size = 0x4, scoped, tag = 'scoped memory for fwd.1']
    #allocation5 [shape = 'u8[49152]{0}', space=vmem, size = 0xc000, scoped, tag = 'input window, operand 2, single buffered']
    %8 = vsyncpa [#allocation4], 0
    %9 = vsyncpa [#allocation3], 0
    // Predicated region
    $region2: #{fwd.1} parent=1 // pred_check
      _
    $region3: #{fwd.1} parent=1 // pred_check_branch
      %11 = sbr.rel (0) target = $region5
    $region4: #{fwd.1} parent=1 // pred_region
      %s13 = ssub.s32 16, 16
      %14 = vsyncadd [#allocation4], %s13
      %s16 = sshll.u32 %s0, 4
      %s17 = int_to_ptr.vmem [resolvable:$true] %s16
      %19 = dma.vmem_to_smem %s17, 16, [#allocation2], [#allocation4]
    $region5: #{fwd.1} parent=1 // pred_fallthru
      _
    // Predicated region
    $region6: #{fwd.1} parent=1 // pred_check
      _
    $region7: #{fwd.1} parent=1 // pred_check_branch
      %21 = sbr.rel (0) target = $region9
    $region8: #{fwd.1} parent=1 // pred_region
      _
    $region9: #{fwd.1} parent=1 // pred_fallthru
      _
    // Predicated region
    $region10: #{fwd.1} parent=1 // pred_check
      _
    $region11: #{fwd.1} parent=1 // pred_check_branch
      %23 = sbr.rel (0) target = $region13
    $region12: #{fwd.1} parent=1 // pred_region
      %s25 = ssub.s32 1536, 1536
      %26 = vsyncadd [#allocation3], %s25
      %s27 = sshll.u32 [#allocation5], 4
      %s28 = int_to_ptr.vmem [resolvable:$true] %s27
      %33 = dma.hbm_to_vmem [thread:$0]  %s2, 1536, %s28, [#allocation3], 128, 128, 8
    $region13: #{fwd.1} parent=1 // pred_fallthru
      _
    // Predicated region
    $region14: #{fwd.1} parent=1 // pred_check
      _
    $region15: #{fwd.1} parent=1 // pred_check_branch
      %35 = sbr.rel (0) target = $region17
    $region16: #{fwd.1} parent=1 // pred_region
      %36 = dma.done [#allocation4], 16
    $region17: #{fwd.1} parent=1 // pred_fallthru
      _
    // Predicated region
    $region18: #{fwd.1} parent=1 // pred_check
      _
    $region19: #{fwd.1} parent=1 // pred_check_branch
      %38 = sbr.rel (0) target = $region21
    $region20: #{fwd.1} parent=1 // pred_region
      %39 = dma.done [#allocation3], 1536
    $region21: #{fwd.1} parent=1 // pred_fallthru
      _
    %40 = sfence
    %v41 = vld [vmem:[%s1] sm:$0xff]
    %v42 = vld [vmem:[%s1 + $0x8] sm:$0x3]
    %s43 = sld [smem:[#allocation2]]
    %s44 = sld [smem:[#allocation2 + $0x1]]
    %vm45 = vcmask 130048
    %v46 = vsel %vm45, %v41, 0.0
    %v47 = vrot.slane %v46, 4
    %v48 = vadd.f32 %v46, %v47
    %v49 = vrot.slane %v48, 2
    %v50 = vadd.f32 %v48, %v49
    %v51 = vrot.slane %v50, 1
    %v52 = vadd.f32 %v50, %v51
    %v53 = vrcp.pop 8.0
    %v54 = vmul.f32 %v52, %v53
    %v55 = vsub.f32 %v41, %v54
    %v56 = vmul.f32 %v55, %v55
    %v57 = vsel %vm45, %v56, 0.0
    %v58 = vrot.slane %v57, 4
    %v59 = vadd.f32 %v57, %v58
    %v60 = vrot.slane %v59, 2
    %v61 = vadd.f32 %v59, %v60
    %v62 = vrot.slane %v61, 1
    %v63 = vadd.f32 %v61, %v62
    %v64 = vmul.f32 %v63, %v53
    %v65 = vsub.f32 %v54, %v42
    %s66 = sadd.f32 %s43, 8.0
    %v67 = vstv %s66
    %v68 = vrcp.pop %v67
    %s69 = vtos %v68
    %s70 = smul.f32 8.0, %s69
    %v71 = vstv %s70
    %v72 = vmul.f32 %v65, %v71
    %v73 = vadd.f32 %v42, %v72
    %v74 = vstv %s43
    %v75 = vmul.f32 %v42, %v74
    %v76 = vmul.f32 %v64, 8.0
    %v77 = vadd.f32 %v75, %v76
    %v78 = vmul.f32 %v65, %v65
    %s79 = smul.f32 %s43, 8.0
    %v80 = vstv %s66
    %v81 = vrcp.pop %v80
    %s82 = vtos %v81
    %s83 = smul.f32 %s79, %s82
    %v84 = vstv %s83
    %v85 = vmul.f32 %v78, %v84
    %v87 = vrot.slane %v85, 7
    %v89 = vadd.f32 %v77, %v87
    %v90 = vstv %s66
    %v91 = vrcp.pop %v90
    %v92 = vmul.f32 %v89, %v91
    %v93 = vadd.f32 %v92, 1e-08
    %v94 = vrsqrt.pop %v93
    %v95 = vmul.f32 %v93, %v94
    %vm96 = vcmp.eq.f32.partialorder %v93, inf
    %v97 = vsel %vm96, %v93, %v95
    %vm98 = vcmp.eq.f32.partialorder %v93, 0.0
    %v99 = vand.u32 %v93, 2147483648
    %v100 = vsel %vm98, %v99, %v97
    %v101 = vlaneseq
    %v102 = vshrl.u32 %v101, 7
    %v103 = vsub.s32 0, %v102
    %v104 = vrot.slane %v73, %v103
    %v105 = vsub.f32 %v41, %v104
    %v106 = vlaneseq
    %v107 = vshrl.u32 %v106, 7
    %v108 = vsub.s32 1, %v107
    %v109 = vrot.slane %v100, %v108
    %v110 = vrcp.pop %v109
    %v111 = vmul.f32 %v105, %v110
    %v112 = vmax.f32 %v111, -5.0
    %v113 = vmin.f32 %v112, 5.0
    %v114 = vld [vmem:[#allocation5] sm:$0xff]
    %v115 = vld [vmem:[#allocation5 + $0x8] sm:$0xff]
    %v116 = vld [vmem:[#allocation5 + $0x10] sm:$0xff]
    %v117 = vld [vmem:[#allocation5 + $0x18] sm:$0xff]
    %v118 = vld [vmem:[#allocation5 + $0x20] sm:$0xff]
    %v119 = vld [vmem:[#allocation5 + $0x28] sm:$0xff]
    %v120 = vld [vmem:[#allocation5 + $0x30] sm:$0x1]
    %v121 = vld [vmem:[#allocation5 + $0x31] sm:$0x1]
    %v122 = vld [vmem:[#allocation5 + $0x38] sm:$0xff]
    %v123 = vld [vmem:[#allocation5 + $0x40] sm:$0xff]
    %v124 = vld [vmem:[#allocation5 + $0x48] sm:$0xff]
    %v125 = vld [vmem:[#allocation5 + $0x50] sm:$0xff]
    %v126 = vld [vmem:[#allocation5 + $0x58] sm:$0x1]
    %v127 = vlaneseq
    %v128 = vshrl.u32 %v127, 7
    %v129 = vsub.s32 0, %v128
    %v130 = vrot.slane %v120, %v129
    %v132 = vsel %vm45, %v113, 0
    %134 = vmatprep.subr.mxu0 0.0
    %135 = vmatpush1.msra.mxu0 %v114
    %136 = vmatprep.subr.mxu0 0.0
    %137 = vmatpush1.msra.mxu0 %v115
    %138 = vmatprep.subr.mxu0 0.0
    %139 = vmatpush1.msra.mxu0 0.0
    %140 = vmatprep.subr.mxu0 0.0
    %141 = vmatpush1.msra.mxu0 0.0
    %142 = vmatprep.subr.mxu0 0.0
    %143 = vmatpush1.msra.mxu0 0.0
    %144 = vmatprep.subr.mxu0 0.0
    %145 = vmatpush1.msra.mxu0 0.0
    %146 = vmatprep.subr.mxu0 0.0
    %147 = vmatpush1.msra.mxu0 0.0
    %148 = vmatprep.subr.mxu0 0.0
    %149 = vmatpush1.msra.mxu0 0.0
    %150 = vmatprep.subr.mxu0 0.0
    %151 = vmatpush1.msra.mxu0 0.0
    %152 = vmatprep.subr.mxu0 0.0
    %153 = vmatpush1.msra.mxu0 0.0
    %154 = vmatprep.subr.mxu0 0.0
    %155 = vmatpush1.msra.mxu0 0.0
    %156 = vmatprep.subr.mxu0 0.0
    %157 = vmatpush1.msra.mxu0 0.0
    %158 = vmatprep.subr.mxu0 0.0
    %159 = vmatpush1.msra.mxu0 0.0
    %160 = vmatprep.subr.mxu0 0.0
    %161 = vmatpush1.msra.mxu0 0.0
    %162 = vmatprep.subr.mxu0 0.0
    %163 = vmatpush1.msra.mxu0 0.0
    %164 = vmatprep.subr.mxu0 0.0
    %165 = vmatpush1.msra.mxu0 0.0
    %166 = vmatprep.subr.mxu0 0.0
    %167 = vmatpush1.msra.mxu0 0.0
    %168 = vmatprep.subr.mxu0 0.0
    %169 = vmatpush1.msra.mxu0 0.0
    %170 = vmatprep.subr.mxu0 0.0
    %171 = vmatpush1.msra.mxu0 0.0
    %172 = vmatprep.subr.mxu0 0.0
    %173 = vmatpush1.msra.mxu0 0.0
    %174 = vmatprep.subr.mxu0 0.0
    %175 = vmatpush1.msra.mxu0 0.0
    %176 = vmatprep.subr.mxu0 0.0
    %177 = vmatpush1.msra.mxu0 0.0
    %178 = vmatprep.subr.mxu0 0.0
    %179 = vmatpush1.msra.mxu0 0.0
    %180 = vmatprep.subr.mxu0 0.0
    %181 = vmatpush1.msra.mxu0 0.0
    %182 = vmatprep.subr.mxu0 0.0
    %183 = vmatpush1.msra.mxu0 0.0
    %184 = vmatprep.subr.mxu0 0.0
    %185 = vmatpush1.msra.mxu0 0.0
    %186 = vmatprep.subr.mxu0 0.0
    %187 = vmatpush1.msra.mxu0 0.0
    %188 = vmatprep.subr.mxu0 0.0
    %189 = vmatpush1.msra.mxu0 0.0
    %190 = vmatprep.subr.mxu0 0.0
    %191 = vmatpush1.msra.mxu0 0.0
    %192 = vmatprep.subr.mxu0 0.0
    %193 = vmatpush1.msra.mxu0 0.0
    %194 = vmatprep.subr.mxu0 0.0
    %195 = vmatpush1.msra.mxu0 0.0
    %196 = vmatprep.subr.mxu0 0.0
    %197 = vmatpush1.msra.mxu0 0.0
    %198 = vmatprep.mubr.f32.mxu0 0.0
    %199 = vmatmul.mubr.f32.gmra.mrb[0].mxu0 %v132
    %v200 = vpop.f32.mrb[0].mxu0
    %v201 = vadd.f32 %v130, %v200
    %v202 = vpop.f32.mrb[0].mxu0
    %203 = vdwg.mxu0
    %v204 = vtanh.pop %v201
    %v205 = vlaneseq
    %v206 = vshrl.u32 %v205, 7
    %v207 = vsub.s32 0, %v206
    %v208 = vrot.slane %v121, %v207
    %vm209 = vcmask 261120
    %v211 = vsel %vm209, %v204, 0
    %213 = vmatprep.subr.mxu0 0.0
    %214 = vmatpush1.msra.mxu0 %v116
    %215 = vmatprep.subr.mxu0 0.0
    %216 = vmatpush1.msra.mxu0 %v117
    %217 = vmatprep.subr.mxu0 0.0
    %218 = vmatpush1.msra.mxu0 %v118
    %219 = vmatprep.subr.mxu0 0.0
    %220 = vmatpush1.msra.mxu0 %v119
    %221 = vmatprep.subr.mxu0 0.0
    %222 = vmatpush1.msra.mxu0 0.0
    %223 = vmatprep.subr.mxu0 0.0
    %224 = vmatpush1.msra.mxu0 0.0
    %225 = vmatprep.subr.mxu0 0.0
    %226 = vmatpush1.msra.mxu0 0.0
    %227 = vmatprep.subr.mxu0 0.0
    %228 = vmatpush1.msra.mxu0 0.0
    %229 = vmatprep.subr.mxu0 0.0
    %230 = vmatpush1.msra.mxu0 0.0
    %231 = vmatprep.subr.mxu0 0.0
    %232 = vmatpush1.msra.mxu0 0.0
    %233 = vmatprep.subr.mxu0 0.0
    %234 = vmatpush1.msra.mxu0 0.0
    %235 = vmatprep.subr.mxu0 0.0
    %236 = vmatpush1.msra.mxu0 0.0
    %237 = vmatprep.subr.mxu0 0.0
    %238 = vmatpush1.msra.mxu0 0.0
    %239 = vmatprep.subr.mxu0 0.0
    %240 = vmatpush1.msra.mxu0 0.0
    %241 = vmatprep.subr.mxu0 0.0
    %242 = vmatpush1.msra.mxu0 0.0
    %243 = vmatprep.subr.mxu0 0.0
    %244 = vmatpush1.msra.mxu0 0.0
    %245 = vmatprep.subr.mxu0 0.0
    %246 = vmatpush1.msra.mxu0 0.0
    %247 = vmatprep.subr.mxu0 0.0
    %248 = vmatpush1.msra.mxu0 0.0
    %249 = vmatprep.subr.mxu0 0.0
    %250 = vmatpush1.msra.mxu0 0.0
    %251 = vmatprep.subr.mxu0 0.0
    %252 = vmatpush1.msra.mxu0 0.0
    %253 = vmatprep.subr.mxu0 0.0
    %254 = vmatpush1.msra.mxu0 0.0
    %255 = vmatprep.subr.mxu0 0.0
    %256 = vmatpush1.msra.mxu0 0.0
    %257 = vmatprep.subr.mxu0 0.0
    %258 = vmatpush1.msra.mxu0 0.0
    %259 = vmatprep.subr.mxu0 0.0
    %260 = vmatpush1.msra.mxu0 0.0
    %261 = vmatprep.subr.mxu0 0.0
    %262 = vmatpush1.msra.mxu0 0.0
    %263 = vmatprep.subr.mxu0 0.0
    %264 = vmatpush1.msra.mxu0 0.0
    %265 = vmatprep.subr.mxu0 0.0
    %266 = vmatpush1.msra.mxu0 0.0
    %267 = vmatprep.subr.mxu0 0.0
    %268 = vmatpush1.msra.mxu0 0.0
    %269 = vmatprep.subr.mxu0 0.0
    %270 = vmatpush1.msra.mxu0 0.0
    %271 = vmatprep.subr.mxu0 0.0
    %272 = vmatpush1.msra.mxu0 0.0
    %273 = vmatprep.subr.mxu0 0.0
    %274 = vmatpush1.msra.mxu0 0.0
    %275 = vmatprep.subr.mxu0 0.0
    %276 = vmatpush1.msra.mxu0 0.0
    %277 = vmatprep.mubr.f32.mxu0 0.0
    %278 = vmatmul.mubr.f32.gmra.mrb[0].mxu0 %v211
    %v279 = vpop.f32.mrb[0].mxu0
    %v280 = vadd.f32 %v208, %v279
    %v281 = vpop.f32.mrb[0].mxu0
    %282 = vdwg.mxu0
    %v283 = vtanh.pop %v280
    %v284 = vlaneseq
    %v285 = vshrl.u32 %v284, 7
    %v286 = vsub.s32 0, %v285
    %v287 = vrot.slane %v126, %v286
    %v289 = vsel %vm209, %v283, 0
    %291 = vmatprep.subr.mxu0 0.0
    %292 = vmatpush1.msra.mxu0 %v122
    %293 = vmatprep.subr.mxu0 0.0
    %294 = vmatpush1.msra.mxu0 %v123
    %295 = vmatprep.subr.mxu0 0.0
    %296 = vmatpush1.msra.mxu0 %v124
    %297 = vmatprep.subr.mxu0 0.0
    %298 = vmatpush1.msra.mxu0 %v125
    %299 = vmatprep.subr.mxu0 0.0
    %300 = vmatpush1.msra.mxu0 0.0
    %301 = vmatprep.subr.mxu0 0.0
    %302 = vmatpush1.msra.mxu0 0.0
    %303 = vmatprep.subr.mxu0 0.0
    %304 = vmatpush1.msra.mxu0 0.0
    %305 = vmatprep.subr.mxu0 0.0
    %306 = vmatpush1.msra.mxu0 0.0
    %307 = vmatprep.subr.mxu0 0.0
    %308 = vmatpush1.msra.mxu0 0.0
    %309 = vmatprep.subr.mxu0 0.0
    %310 = vmatpush1.msra.mxu0 0.0
    %311 = vmatprep.subr.mxu0 0.0
    %312 = vmatpush1.msra.mxu0 0.0
    %313 = vmatprep.subr.mxu0 0.0
    %314 = vmatpush1.msra.mxu0 0.0
    %315 = vmatprep.subr.mxu0 0.0
    %316 = vmatpush1.msra.mxu0 0.0
    %317 = vmatprep.subr.mxu0 0.0
    %318 = vmatpush1.msra.mxu0 0.0
    %319 = vmatprep.subr.mxu0 0.0
    %320 = vmatpush1.msra.mxu0 0.0
    %321 = vmatprep.subr.mxu0 0.0
    %322 = vmatpush1.msra.mxu0 0.0
    %323 = vmatprep.subr.mxu0 0.0
    %324 = vmatpush1.msra.mxu0 0.0
    %325 = vmatprep.subr.mxu0 0.0
    %326 = vmatpush1.msra.mxu0 0.0
    %327 = vmatprep.subr.mxu0 0.0
    %328 = vmatpush1.msra.mxu0 0.0
    %329 = vmatprep.subr.mxu0 0.0
    %330 = vmatpush1.msra.mxu0 0.0
    %331 = vmatprep.subr.mxu0 0.0
    %332 = vmatpush1.msra.mxu0 0.0
    %333 = vmatprep.subr.mxu0 0.0
    %334 = vmatpush1.msra.mxu0 0.0
    %335 = vmatprep.subr.mxu0 0.0
    %336 = vmatpush1.msra.mxu0 0.0
    %337 = vmatprep.subr.mxu0 0.0
    %338 = vmatpush1.msra.mxu0 0.0
    %339 = vmatprep.subr.mxu0 0.0
    %340 = vmatpush1.msra.mxu0 0.0
    %341 = vmatprep.subr.mxu0 0.0
    %342 = vmatpush1.msra.mxu0 0.0
    %343 = vmatprep.subr.mxu0 0.0
    %344 = vmatpush1.msra.mxu0 0.0
    %345 = vmatprep.subr.mxu0 0.0
    %346 = vmatpush1.msra.mxu0 0.0
    %347 = vmatprep.subr.mxu0 0.0
    %348 = vmatpush1.msra.mxu0 0.0
    %349 = vmatprep.subr.mxu0 0.0
    %350 = vmatpush1.msra.mxu0 0.0
    %351 = vmatprep.subr.mxu0 0.0
    %352 = vmatpush1.msra.mxu0 0.0
    %353 = vmatprep.subr.mxu0 0.0
    %354 = vmatpush1.msra.mxu0 0.0
    %355 = vmatprep.mubr.f32.mxu0 0.0
    %356 = vmatmul.mubr.f32.gmra.mrb[0].mxu0 %v289
    %v357 = vpop.f32.mrb[0].mxu0
    %v358 = vadd.f32 %v287, %v357
    %v359 = vpop.f32.mrb[0].mxu0
    %360 = vdwg.mxu0
    %vm361 = vcmask 48136
    %v362 = vsel %vm361, %v358, -inf
    %363 = vmax.xlane.f32.xlu0 %v362
    %v364 = vpop.xlane.xlu0 %363
    %v365 = vlaneseq
    %v366 = vand.u32 %v365, 127
    %vm367 = vcmp.eq.f32.partialorder %v358, %v364
    %368 = vrot.lane.b32.xlu0 %v366, 1
    %v369 = vpop.permute.xlu0 %368
    %v370 = vsel %vm367, %v369, 5
    %v371 = vsel %vm361, %v370, 2147483647
    %v372 = vand.u32 %v371, 65535
    %v373 = vshra.s32 %v371, 16
    %v374 = vcvt.s32.f32 %v372
    %v375 = vcvt.s32.f32 %v373
    %376 = vmin.xlane.f32.xlu0 %v375
    %v377 = vpop.xlane.xlu0 %376
    %vm378 = vcmp.eq.f32.partialorder %v375, %v377
    %v379 = vsel %vm378, %v374, inf
    %380 = vmin.xlane.f32.xlu0 %v379
    %v381 = vpop.xlane.xlu0 %380
    %v382 = vcvt.f32.s32 %v381
    %v383 = vcvt.f32.s32 %v377
    %v384 = vshll.u32 %v383, 16
    %v385 = vadd.s32 %v384, %v382
    %v386 = vsub.f32 %v358, %v364
    %v387 = vmul.f32 %v386, 1.442695
    %v388 = vpow.pop %v387
    %390 = vrot.lane.b32.xlu0 %v388, 127
    %v391 = vpop.permute.xlu0 %390
    %vm393 = vcmask 39936
    %v394 = vsel %vm393, %v391, 0.0
    %395 = vadd.xlane.f32.xlu0 %v394
    %v396 = vpop.xlane.xlu0 %395
    %v397 = vlog2.pop %v396
    %v398 = vmul.f32 %v397, 0.6931472
    %v399 = vadd.f32 %v364, %v398
    %v400 = vsub.f32 %v364, %v399
    %v401 = vstv %s44
    %v402 = vadd.f32 %v400, %v401
    %v403 = vtanh.pop %v358
    %v404 = vadd.f32 %v403, 1.0
    %v405 = vmul.f32 %v404, 0.5
    %vm406 = vcmask 1040384
    %v407 = vsel %vm406, %v73, %v92
    %vm408 = vcmask 1041408
    %v409 = vsel %vm408, %v407, 0.0
    %v410 = vcvt.s32.f32 %v385
    %412 = vrot.lane.b32.xlu0 %v405, 5
    %v413 = vpop.permute.xlu0 %412
    %416 = vrot.lane.b32.xlu0 %v409, 14
    %v417 = vpop.permute.xlu0 %416
    %vm419 = vcmask 72704
    %v420 = vsel %vm419, %v358, %v402
    %vm421 = vcmask 80896
    %v422 = vsel %vm421, %v420, %v410
    %vm423 = vcmask 89088
    %v424 = vsel %vm423, %v422, %v413
    %vm425 = vcmask 113664
    %v426 = vsel %vm425, %v424, %v417
    %vm427 = vcmask 244736
    %v428 = vsel %vm427, %v426, 0.0
    %429 = vst [vmem:[%s3] sm:$0xff] %v428
    // Predicated region
    $region22: #{fwd.1} parent=1 // pred_check
      _
    $region23: #{fwd.1} parent=1 // pred_check_branch
      %431 = sbr.rel (0) target = $region25
    $region24: #{fwd.1} parent=1 // pred_region
      _
    $region25: #{fwd.1} parent=1 // pred_fallthru
      _
    // Predicated region
    $region26: #{fwd.1} parent=1 // pred_check
      _
    $region27: #{fwd.1} parent=1 // pred_check_branch
      %433 = sbr.rel (0) target = $region29
    $region28: #{fwd.1} parent=1 // pred_region
      _
    $region29: #{fwd.1} parent=1 // pred_fallthru
      _
    %434 = vsyncpa [#allocation3], 1
    %435 = vsyncpa [#allocation4], 1

</llo_original>
